<compile_context>
chip_gen: v6e
topology: v6e:2x2x1
jax: 0.10.0
libtpu: 0.0.40
codegen_flags: <defaults>
</compile_context>

<pallas_src>
import collections
import functools

import jax
import jax.numpy as jnp
from jax.experimental import pallas as pl
from jax.experimental.pallas import tpu as pltpu


LayerCfg = collections.namedtuple(
    "LayerCfg", ["n_in", "n_out", "normalize", "activation", "dropout"])

_BN_EPS = 0.8          # nn.BatchNorm1d(n_out, 0.8) -> eps = 0.8
_LEAKY_SLOPE = 0.1     # nn.LeakyReLU(0.1)


def _make_fused_kernel(cfgs):
    """One kernel body chaining every configured layer, fully VMEM-resident."""

    def kernel(*refs):
        o_ref = refs[-1]
        it = iter(refs[:-1])
        h = next(it)[...]                               # x: (B, n_in0) f32
        for cfg in cfgs:
            w_ref = next(it)                            # (n_in, n_out) == torch W.T
            b_ref = next(it)                            # (1, n_out)
            # MXU matmul: bf16 operands, f32 accumulation (torch Linear semantics).
            z = jnp.dot(h.astype(jnp.bfloat16),
                        w_ref[...].astype(jnp.bfloat16),
                        preferred_element_type=jnp.float32) + b_ref[...]
            if cfg.normalize:
                gamma = next(it)[...]
                beta = next(it)[...]
                # torch BatchNorm1d training mode: batch mean, biased batch variance.
                mean = jnp.mean(z, axis=0, keepdims=True)
                var = jnp.mean((z - mean) ** 2, axis=0, keepdims=True)
                z = (z - mean) * jax.lax.rsqrt(var + _BN_EPS)
                z = z * gamma + beta
            if cfg.activation == "sigmoid":
                z = jax.nn.sigmoid(z)
            elif cfg.activation == "leakyrelu":
                z = jnp.where(z >= 0.0, z, _LEAKY_SLOPE * z)
            elif cfg.activation == "tanh":
                z = jnp.tanh(z)
            if cfg.dropout:
                # Pre-scaled inverted-dropout mask (keep / (1-p)), drawn outside.
                z = z * next(it)[...]
            h = z
        o_ref[...] = h

    return kernel


@functools.partial(jax.jit, static_argnames=("cfgs",))
def mlp_forward(x, params, dropout_key, *, cfgs):
    """Full fused forward pass: a single pallas_call for the entire MLP."""
    B = x.shape[0]
    inputs = [x]
    for i, (cfg, p) in enumerate(zip(cfgs, params)):
        inputs += [p["w_t"], p["b"]]
        if cfg.normalize:
            inputs += [p["gamma"], p["beta"]]
        if cfg.dropout:
            # TODO(synk): torch's dropout RNG stream is not reproducible; the mask
            # is drawn from a jax.random key (pass a fresh key each training step).
            keep_p = 1.0 - float(cfg.dropout)
            keep = jax.random.bernoulli(
                jax.random.fold_in(dropout_key, i), keep_p, (B, cfg.n_out))
            inputs.append(keep.astype(jnp.float32) * (1.0 / keep_p))

    vmem = pl.BlockSpec(memory_space=pltpu.MemorySpace.VMEM)
    return pl.pallas_call(
        _make_fused_kernel(cfgs),
        out_shape=jax.ShapeDtypeStruct((B, cfgs[-1].n_out), jnp.float32),
        in_specs=[vmem] * len(inputs),
        out_specs=vmem,
    )(*inputs)


def init_mlp_params(key, cfgs):
    """Deterministic parameter init matching the torch module's init_weights."""
    params = []
    for cfg in cfgs:
        key, wkey = jax.random.split(key)
        bound = (6.0 / (cfg.n_in + cfg.n_out)) ** 0.5        # xavier_uniform_
        w = jax.random.uniform(wkey, (cfg.n_out, cfg.n_in), jnp.float32,
                               -bound, bound)
        params.append(dict(
            w_t=w.T,                                          # (n_in, n_out)
            b=jnp.full((1, cfg.n_out), 0.01, jnp.float32),    # bias.data.fill_(0.01)
            gamma=jnp.ones((1, cfg.n_out), jnp.float32),      # BatchNorm1d affine defaults
            beta=jnp.zeros((1, cfg.n_out), jnp.float32),
        ))
    return tuple(params)


if __name__ == "__main__":
    # Mirrors the torch `list_of_layers` constructor argument.
    cfgs = (
        LayerCfg(n_in=32, n_out=64, normalize=True,  activation="leakyrelu", dropout=0.0),
        LayerCfg(n_in=64, n_out=32, normalize=False, activation="tanh",      dropout=0.25),
        LayerCfg(n_in=32, n_out=16, normalize=False, activation="sigmoid",   dropout=0.0),
    )

    key = jax.random.PRNGKey(0)
    key, xkey, pkey, dkey = jax.random.split(key, 4)

    x = jax.random.normal(xkey, (8, 32), jnp.float32)         # (batch, features)
    params = init_mlp_params(pkey, cfgs)

    out = mlp_forward(x, params, dkey, cfgs=cfgs)
    out = jax.block_until_ready(out)

    assert out.shape == (8, 16) and out.dtype == jnp.float32
    assert bool(jnp.all(jnp.isfinite(out)))
    print("KERNEL_OK")
</pallas_src>

<mosaic_0001>
module attributes {stable_mosaic.version = 11 : i64} {
  func.func @kernel(%arg0: memref<8x32xf32, #tpu.memory_space<vmem>>, %arg1: memref<32x64xf32, #tpu.memory_space<vmem>>, %arg2: memref<1x64xf32, #tpu.memory_space<vmem>>, %arg3: memref<1x64xf32, #tpu.memory_space<vmem>>, %arg4: memref<1x64xf32, #tpu.memory_space<vmem>>, %arg5: memref<64x32xf32, #tpu.memory_space<vmem>>, %arg6: memref<1x32xf32, #tpu.memory_space<vmem>>, %arg7: memref<8x32xf32, #tpu.memory_space<vmem>>, %arg8: memref<32x16xf32, #tpu.memory_space<vmem>>, %arg9: memref<1x16xf32, #tpu.memory_space<vmem>>, %arg10: memref<8x16xf32, #tpu.memory_space<vmem>>) attributes {dimension_semantics = [], scalar_prefetch = 0 : i64, scratch_operands = 0 : i64, tpu.core_type = #tpu.core_type<tc>} {
    %c0 = arith.constant 0 : index
    %c0_0 = arith.constant 0 : index
    %0 = vector.load %arg0[%c0, %c0_0] : memref<8x32xf32, #tpu.memory_space<vmem>>, vector<8x32xf32>
    %1 = arith.truncf %0 : vector<8x32xf32> to vector<8x32xbf16>
    %c0_1 = arith.constant 0 : index
    %c0_2 = arith.constant 0 : index
    %2 = vector.load %arg1[%c0_1, %c0_2] : memref<32x64xf32, #tpu.memory_space<vmem>>, vector<32x64xf32>
    %3 = arith.truncf %2 : vector<32x64xf32> to vector<32x64xbf16>
    %cst = arith.constant dense<0.000000e+00> : vector<8x64xf32>
    %4 = tpu.matmul %1, %3, %cst {dimension_numbers = #tpu.dot_dimension_numbers<[1], [0], [0], [1], [0, 0, 1, 1], [], []>} : vector<8x32xbf16>, vector<32x64xbf16>, vector<8x64xf32> -> vector<8x64xf32>
    %c0_3 = arith.constant 0 : index
    %c0_4 = arith.constant 0 : index
    %5 = vector.load %arg2[%c0_3, %c0_4] : memref<1x64xf32, #tpu.memory_space<vmem>>, vector<1x64xf32>
    %6 = vector.broadcast %5 : vector<1x64xf32> to vector<8x64xf32>
    %7 = arith.addf %4, %6 : vector<8x64xf32>
    %c0_5 = arith.constant 0 : index
    %c0_6 = arith.constant 0 : index
    %8 = vector.load %arg3[%c0_5, %c0_6] : memref<1x64xf32, #tpu.memory_space<vmem>>, vector<1x64xf32>
    %c0_7 = arith.constant 0 : index
    %c0_8 = arith.constant 0 : index
    %9 = vector.load %arg4[%c0_7, %c0_8] : memref<1x64xf32, #tpu.memory_space<vmem>>, vector<1x64xf32>
    %cst_9 = arith.constant dense<0.000000e+00> : vector<64xf32>
    %10 = vector.multi_reduction <add>, %7, %cst_9 [0] : vector<8x64xf32> to vector<64xf32>
    %11 = vector.shape_cast %10 : vector<64xf32> to vector<1x64xf32>
    %cst_10 = arith.constant 8.000000e+00 : f32
    %12 = vector.broadcast %cst_10 : f32 to vector<1x64xf32>
    %13 = arith.divf %11, %12 : vector<1x64xf32>
    %14 = vector.broadcast %13 : vector<1x64xf32> to vector<8x64xf32>
    %15 = arith.subf %7, %14 : vector<8x64xf32>
    %16 = arith.mulf %15, %15 : vector<8x64xf32>
    %cst_11 = arith.constant dense<0.000000e+00> : vector<64xf32>
    %17 = vector.multi_reduction <add>, %16, %cst_11 [0] : vector<8x64xf32> to vector<64xf32>
    %18 = vector.shape_cast %17 : vector<64xf32> to vector<1x64xf32>
    %cst_12 = arith.constant 8.000000e+00 : f32
    %19 = vector.broadcast %cst_12 : f32 to vector<1x64xf32>
    %20 = arith.divf %18, %19 : vector<1x64xf32>
    %21 = vector.broadcast %13 : vector<1x64xf32> to vector<8x64xf32>
    %22 = arith.subf %7, %21 : vector<8x64xf32>
    %cst_13 = arith.constant 8.000000e-01 : f32
    %23 = vector.broadcast %cst_13 : f32 to vector<1x64xf32>
    %24 = arith.addf %20, %23 : vector<1x64xf32>
    %25 = math.rsqrt %24 : vector<1x64xf32>
    %26 = vector.broadcast %25 : vector<1x64xf32> to vector<8x64xf32>
    %27 = arith.mulf %22, %26 : vector<8x64xf32>
    %28 = vector.broadcast %8 : vector<1x64xf32> to vector<8x64xf32>
    %29 = arith.mulf %27, %28 : vector<8x64xf32>
    %30 = vector.broadcast %9 : vector<1x64xf32> to vector<8x64xf32>
    %31 = arith.addf %29, %30 : vector<8x64xf32>
    %cst_14 = arith.constant 0.000000e+00 : f32
    %32 = vector.broadcast %cst_14 : f32 to vector<8x64xf32>
    %33 = arith.cmpf oge, %31, %32 : vector<8x64xf32>
    %cst_15 = arith.constant 1.000000e-01 : f32
    %34 = vector.broadcast %cst_15 : f32 to vector<8x64xf32>
    %35 = arith.mulf %34, %31 : vector<8x64xf32>
    %36 = arith.select %33, %31, %35 : vector<8x64xi1>, vector<8x64xf32>
    %37 = arith.truncf %36 : vector<8x64xf32> to vector<8x64xbf16>
    %c0_16 = arith.constant 0 : index
    %c0_17 = arith.constant 0 : index
    %38 = vector.load %arg5[%c0_16, %c0_17] : memref<64x32xf32, #tpu.memory_space<vmem>>, vector<64x32xf32>
    %39 = arith.truncf %38 : vector<64x32xf32> to vector<64x32xbf16>
    %cst_18 = arith.constant dense<0.000000e+00> : vector<8x32xf32>
    %40 = tpu.matmul %37, %39, %cst_18 {dimension_numbers = #tpu.dot_dimension_numbers<[1], [0], [0], [1], [0, 0, 1, 1], [], []>} : vector<8x64xbf16>, vector<64x32xbf16>, vector<8x32xf32> -> vector<8x32xf32>
    %c0_19 = arith.constant 0 : index
    %c0_20 = arith.constant 0 : index
    %41 = vector.load %arg6[%c0_19, %c0_20] : memref<1x32xf32, #tpu.memory_space<vmem>>, vector<1x32xf32>
    %42 = vector.broadcast %41 : vector<1x32xf32> to vector<8x32xf32>
    %43 = arith.addf %40, %42 : vector<8x32xf32>
    %44 = math.tanh %43 : vector<8x32xf32>
    %c0_21 = arith.constant 0 : index
    %c0_22 = arith.constant 0 : index
    %45 = vector.load %arg7[%c0_21, %c0_22] : memref<8x32xf32, #tpu.memory_space<vmem>>, vector<8x32xf32>
    %46 = arith.mulf %44, %45 : vector<8x32xf32>
    %47 = arith.truncf %46 : vector<8x32xf32> to vector<8x32xbf16>
    %c0_23 = arith.constant 0 : index
    %c0_24 = arith.constant 0 : index
    %48 = vector.load %arg8[%c0_23, %c0_24] : memref<32x16xf32, #tpu.memory_space<vmem>>, vector<32x16xf32>
    %49 = arith.truncf %48 : vector<32x16xf32> to vector<32x16xbf16>
    %cst_25 = arith.constant dense<0.000000e+00> : vector<8x16xf32>
    %50 = tpu.matmul %47, %49, %cst_25 {dimension_numbers = #tpu.dot_dimension_numbers<[1], [0], [0], [1], [0, 0, 1, 1], [], []>} : vector<8x32xbf16>, vector<32x16xbf16>, vector<8x16xf32> -> vector<8x16xf32>
    %c0_26 = arith.constant 0 : index
    %c0_27 = arith.constant 0 : index
    %51 = vector.load %arg9[%c0_26, %c0_27] : memref<1x16xf32, #tpu.memory_space<vmem>>, vector<1x16xf32>
    %52 = vector.broadcast %51 : vector<1x16xf32> to vector<8x16xf32>
    %53 = arith.addf %50, %52 : vector<8x16xf32>
    %54 = arith.negf %53 : vector<8x16xf32>
    %55 = math.exp %54 : vector<8x16xf32>
    %cst_28 = arith.constant 1.000000e+00 : f32
    %56 = vector.broadcast %cst_28 : f32 to vector<8x16xf32>
    %57 = arith.addf %56, %55 : vector<8x16xf32>
    %58 = arith.divf %56, %57 : vector<8x16xf32>
    %c0_29 = arith.constant 0 : index
    %c0_30 = arith.constant 0 : index
    %59 = vector.load %arg10[%c0_29, %c0_30] : memref<8x16xf32, #tpu.memory_space<vmem>>, vector<8x16xf32>
    tpu.vector_store %arg10[%c0_29, %c0_30], %58 {strides = array<i32>} : memref<8x16xf32, #tpu.memory_space<vmem>>, vector<8x16xf32>,
    return
  }
}

</mosaic_0001>

<llo_original>
// kernel: mlp_forward.3
$region0: #{mlp_forward.3}
  #allocation0 [shape = 'u32[]', space=smem, size = 0x4, offset = 0x4, fixed_abs, tag = 'smem constant byte address 0x4 - core index']
  #allocation1 [shape = 'u32[144,128]{1,0:T(1,128)}', space=vmem, size = 0x12000, scoped, tag = 'internal scratch']
  %s0 = inlined_call_operand.vmem [shape: f32[8,32], index: 0, kind: input, shape index: {}]
  %s1 = inlined_call_operand.vmem [shape: f32[32,64], index: 1, kind: input, shape index: {}]
  %s2 = inlined_call_operand.vmem [shape: f32[1,64], index: 2, kind: input, shape index: {}]
  %s3 = inlined_call_operand.vmem [shape: f32[1,64], index: 3, kind: input, shape index: {}]
  %s4 = inlined_call_operand.vmem [shape: f32[1,64], index: 4, kind: input, shape index: {}]
  %s5 = inlined_call_operand.vmem [shape: f32[64,32], index: 5, kind: input, shape index: {}]
  %s6 = inlined_call_operand.vmem [shape: f32[1,32], index: 6, kind: input, shape index: {}]
  %s7 = inlined_call_operand.vmem [shape: f32[8,32], index: 7, kind: input, shape index: {}]
  %s8 = inlined_call_operand.vmem [shape: f32[32,16], index: 8, kind: input, shape index: {}]
  %s9 = inlined_call_operand.vmem [shape: f32[1,16], index: 9, kind: input, shape index: {}]
  %s10 = inlined_call_operand.hbm [shape: f32[8,16], index: 10, kind: output, shape index: {}]
  %s11 = sld [smem:[#allocation0]]
  $region50: #{mlp_forward.3} parent=0
    _
  %s13 = ssub.s32 1, %s11
  %s14 = scalar_select 0, %s13, %s11
  $region1: #{mlp_forward.3} parent=0
    #allocation2 [shape = 'u8[4096]{0}', space=vmem, size = 0x1000, scoped, tag = 'output window, operand 0, single buffered']
    #allocation3 [shape = 's32[1]{0}', space=sflag, size = 0x4, scoped, tag = 'scoped memory for mlp_forward.3']
    %15 = vsyncpa [#allocation3], 0
    // Predicated region
    $region2: #{mlp_forward.3} parent=1 // pred_check
      _
    $region3: #{mlp_forward.3} parent=1 // pred_check_branch
      %17 = sbr.rel (0) target = $region5
    $region4: #{mlp_forward.3} parent=1 // pred_region
      _
    $region5: #{mlp_forward.3} parent=1 // pred_fallthru
      _
    // Predicated region
    $region6: #{mlp_forward.3} parent=1 // pred_check
      _
    $region7: #{mlp_forward.3} parent=1 // pred_check_branch
      %19 = sbr.rel (0) target = $region9
    $region8: #{mlp_forward.3} parent=1 // pred_region
      _
    $region9: #{mlp_forward.3} parent=1 // pred_fallthru
      _
    // Predicated region
    $region10: #{mlp_forward.3} parent=1 // pred_check
      _
    $region11: #{mlp_forward.3} parent=1 // pred_check_branch
      %21 = sbr.rel (0) target = $region13
    $region12: #{mlp_forward.3} parent=1 // pred_region
      _
    $region13: #{mlp_forward.3} parent=1 // pred_fallthru
      _
    // Predicated region
    $region14: #{mlp_forward.3} parent=1 // pred_check
      _
    $region15: #{mlp_forward.3} parent=1 // pred_check_branch
      %23 = sbr.rel (0) target = $region17
    $region16: #{mlp_forward.3} parent=1 // pred_region
      _
    $region17: #{mlp_forward.3} parent=1 // pred_fallthru
      _
    // Predicated region
    $region18: #{mlp_forward.3} parent=1 // pred_check
      _
    $region19: #{mlp_forward.3} parent=1 // pred_check_branch
      %25 = sbr.rel (0) target = $region21
    $region20: #{mlp_forward.3} parent=1 // pred_region
      _
    $region21: #{mlp_forward.3} parent=1 // pred_fallthru
      _
    // Predicated region
    $region22: #{mlp_forward.3} parent=1 // pred_check
      _
    $region23: #{mlp_forward.3} parent=1 // pred_check_branch
      %27 = sbr.rel (0) target = $region25
    $region24: #{mlp_forward.3} parent=1 // pred_region
      _
    $region25: #{mlp_forward.3} parent=1 // pred_fallthru
      _
    // Predicated region
    $region26: #{mlp_forward.3} parent=1 // pred_check
      _
    $region27: #{mlp_forward.3} parent=1 // pred_check_branch
      %29 = sbr.rel (0) target = $region29
    $region28: #{mlp_forward.3} parent=1 // pred_region
      _
    $region29: #{mlp_forward.3} parent=1 // pred_fallthru
      _
    // Predicated region
    $region30: #{mlp_forward.3} parent=1 // pred_check
      _
    $region31: #{mlp_forward.3} parent=1 // pred_check_branch
      %31 = sbr.rel (0) target = $region33
    $region32: #{mlp_forward.3} parent=1 // pred_region
      _
    $region33: #{mlp_forward.3} parent=1 // pred_fallthru
      _
    // Predicated region
    $region34: #{mlp_forward.3} parent=1 // pred_check
      _
    $region35: #{mlp_forward.3} parent=1 // pred_check_branch
      %33 = sbr.rel (0) target = $region37
    $region36: #{mlp_forward.3} parent=1 // pred_region
      _
    $region37: #{mlp_forward.3} parent=1 // pred_fallthru
      _
    // Predicated region
    $region38: #{mlp_forward.3} parent=1 // pred_check
      _
    $region39: #{mlp_forward.3} parent=1 // pred_check_branch
      %35 = sbr.rel (0) target = $region41
    $region40: #{mlp_forward.3} parent=1 // pred_region
      _
    $region41: #{mlp_forward.3} parent=1 // pred_fallthru
      _
    %v37 = vld [vmem:[%s0] sm:$0xff]
    %v38 = vpack.c.bf16 %v37, %v37
    %v39 = vld [vmem:[%s1] sm:$0xff]
    %v40 = vld [vmem:[%s1 + $0x8] sm:$0xff]
    %v41 = vld [vmem:[%s1 + $0x10] sm:$0xff]
    %v42 = vld [vmem:[%s1 + $0x18] sm:$0xff]
    %v43 = vpack.c.bf16 %v40, %v39
    %v44 = vpack.c.bf16 %v42, %v41
    %v45 = vld [vmem:[%s2] sm:$0x1]
    %v47 = vlaneseq
    %v48 = vshrl.u32 %v47, 7
    %v49 = vsub.s32 0, %v48
    %v50 = vrot.slane %v45, %v49
    %vm52 = vcmask 261120
    %v54 = vsel %vm52, %v38, 0
    %56 = vmatprep.subr.bf16.mxu0 0
    %57 = vmatpush1.bf16.msra.mxu0 0
    %58 = vmatprep.subr.bf16.mxu0 0
    %59 = vmatpush1.bf16.msra.mxu0 0
    %60 = vmatprep.subr.bf16.mxu0 0
    %61 = vmatpush1.bf16.msra.mxu0 0
    %62 = vmatprep.subr.bf16.mxu0 0
    %63 = vmatpush1.bf16.msra.mxu0 0
    %64 = vmatprep.subr.bf16.mxu0 0
    %65 = vmatpush1.bf16.msra.mxu0 0
    %66 = vmatprep.subr.bf16.mxu0 0
    %67 = vmatpush1.bf16.msra.mxu0 0
    %68 = vmatprep.subr.bf16.mxu0 0
    %69 = vmatpush1.bf16.msra.mxu0 %v44
    %70 = vmatprep.subr.bf16.mxu0 0
    %71 = vmatpush1.bf16.msra.mxu0 %v43
    %72 = vmatprep.subr.bf16.mxu0 0
    %73 = vmatpush2.bf16.msra.mxu0 0
    %74 = vmatprep.subr.bf16.mxu0 0
    %75 = vmatpush2.bf16.msra.mxu0 0
    %76 = vmatprep.subr.bf16.mxu0 0
    %77 = vmatpush2.bf16.msra.mxu0 0
    %78 = vmatprep.subr.bf16.mxu0 0
    %79 = vmatpush2.bf16.msra.mxu0 0
    %80 = vmatprep.subr.bf16.mxu0 0
    %81 = vmatpush2.bf16.msra.mxu0 0
    %82 = vmatprep.subr.bf16.mxu0 0
    %83 = vmatpush2.bf16.msra.mxu0 0
    %84 = vmatprep.subr.bf16.mxu0 0
    %85 = vmatpush2.bf16.msra.mxu0 0
    %86 = vmatprep.subr.bf16.mxu0 0
    %87 = vmatpush2.bf16.msra.mxu0 0
    %88 = vmatprep.mubr.bf16.mxu0 0
    %89 = vmatmul.mubr.bf16.gmra.mxu0 %v54
    %v90 = vpop.f32.mrf.mxu0
    %v91 = vadd.f32 %v50, %v90
    %v92 = vpop.f32.mrf.mxu0
    %v93 = vpop.f32.mrf.mxu0
    %v94 = vpop.f32.mrf.mxu0
    %95 = vdwg.mxu0
    %v96 = vld [vmem:[%s3] sm:$0x1]
    %v97 = vld [vmem:[%s4] sm:$0x1]
    %vm98 = vcmask 523264
    %v99 = vsel %vm98, %v91, 0.0
    %v100 = vrot.slane %v99, 4
    %v101 = vadd.f32 %v99, %v100
    %v102 = vrot.slane %v101, 2
    %v103 = vadd.f32 %v101, %v102
    %v104 = vrot.slane %v103, 1
    %v105 = vadd.f32 %v103, %v104
    %v106 = vrcp.pop 8.0
    %v107 = vmul.f32 %v105, %v106
    %v108 = vsub.f32 %v91, %v107
    %v109 = vmul.f32 %v108, %v108
    %v110 = vsel %vm98, %v109, 0.0
    %v111 = vrot.slane %v110, 4
    %v112 = vadd.f32 %v110, %v111
    %v113 = vrot.slane %v112, 2
    %v114 = vadd.f32 %v112, %v113
    %v115 = vrot.slane %v114, 1
    %v116 = vadd.f32 %v114, %v115
    %v117 = vmul.f32 %v116, %v106
    %v118 = vadd.f32 %v117, 0.8
    %v119 = vrsqrt.pop %v118
    %v120 = vmul.f32 %v108, %v119
    %v122 = vlaneseq
    %v123 = vshrl.u32 %v122, 7
    %v124 = vsub.s32 0, %v123
    %v125 = vrot.slane %v96, %v124
    %v127 = vmul.f32 %v120, %v125
    %v129 = vlaneseq
    %v130 = vshrl.u32 %v129, 7
    %v131 = vsub.s32 0, %v130
    %v132 = vrot.slane %v97, %v131
    %v134 = vadd.f32 %v127, %v132
    %vm135 = vcmp.ge.f32.partialorder %v134, 0.0
    %v136 = vmul.f32 %v134, 0.1
    %v137 = vsel %vm135, %v134, %v136
    %v138 = vpack.c.bf16 %v137, %v137
    %v139 = vld [vmem:[%s5] sm:$0xff]
    %v140 = vld [vmem:[%s5 + $0x8] sm:$0xff]
    %v141 = vld [vmem:[%s5 + $0x10] sm:$0xff]
    %v142 = vld [vmem:[%s5 + $0x18] sm:$0xff]
    %v143 = vld [vmem:[%s5 + $0x20] sm:$0xff]
    %v144 = vld [vmem:[%s5 + $0x28] sm:$0xff]
    %v145 = vld [vmem:[%s5 + $0x30] sm:$0xff]
    %v146 = vld [vmem:[%s5 + $0x38] sm:$0xff]
    %v147 = vpack.c.bf16 %v140, %v139
    %v148 = vpack.c.bf16 %v142, %v141
    %v149 = vpack.c.bf16 %v144, %v143
    %v150 = vpack.c.bf16 %v146, %v145
    %v151 = vld [vmem:[%s6] sm:$0x1]
    %v153 = vlaneseq
    %v154 = vshrl.u32 %v153, 7
    %v155 = vsub.s32 0, %v154
    %v156 = vrot.slane %v151, %v155
    %v159 = vsel %vm98, %v138, 0
    %161 = vmatprep.subr.bf16.mxu0 0
    %162 = vmatpush1.bf16.msra.mxu0 0
    %163 = vmatprep.subr.bf16.mxu0 0
    %164 = vmatpush1.bf16.msra.mxu0 0
    %165 = vmatprep.subr.bf16.mxu0 0
    %166 = vmatpush1.bf16.msra.mxu0 0
    %167 = vmatprep.subr.bf16.mxu0 0
    %168 = vmatpush1.bf16.msra.mxu0 0
    %169 = vmatprep.subr.bf16.mxu0 0
    %170 = vmatpush1.bf16.msra.mxu0 %v150
    %171 = vmatprep.subr.bf16.mxu0 0
    %172 = vmatpush1.bf16.msra.mxu0 %v149
    %173 = vmatprep.subr.bf16.mxu0 0
    %174 = vmatpush1.bf16.msra.mxu0 %v148
    %175 = vmatprep.subr.bf16.mxu0 0
    %176 = vmatpush1.bf16.msra.mxu0 %v147
    %177 = vmatprep.subr.bf16.mxu0 0
    %178 = vmatpush2.bf16.msra.mxu0 0
    %179 = vmatprep.subr.bf16.mxu0 0
    %180 = vmatpush2.bf16.msra.mxu0 0
    %181 = vmatprep.subr.bf16.mxu0 0
    %182 = vmatpush2.bf16.msra.mxu0 0
    %183 = vmatprep.subr.bf16.mxu0 0
    %184 = vmatpush2.bf16.msra.mxu0 0
    %185 = vmatprep.subr.bf16.mxu0 0
    %186 = vmatpush2.bf16.msra.mxu0 0
    %187 = vmatprep.subr.bf16.mxu0 0
    %188 = vmatpush2.bf16.msra.mxu0 0
    %189 = vmatprep.subr.bf16.mxu0 0
    %190 = vmatpush2.bf16.msra.mxu0 0
    %191 = vmatprep.subr.bf16.mxu0 0
    %192 = vmatpush2.bf16.msra.mxu0 0
    %193 = vmatprep.mubr.bf16.mxu0 0
    %194 = vmatmul.mubr.bf16.gmra.mxu0 %v159
    %v195 = vpop.f32.mrf.mxu0
    %v196 = vadd.f32 %v156, %v195
    %v197 = vpop.f32.mrf.mxu0
    %v198 = vpop.f32.mrf.mxu0
    %v199 = vpop.f32.mrf.mxu0
    %200 = vdwg.mxu0
    %v201 = vtanh.pop %v196
    %v202 = vld [vmem:[%s7] sm:$0xff]
    %v203 = vmul.f32 %v201, %v202
    %v204 = vpack.c.bf16 %v203, %v203
    %v205 = vld [vmem:[%s8] sm:$0xff]
    %v206 = vld [vmem:[%s8 + $0x8] sm:$0xff]
    %v207 = vld [vmem:[%s8 + $0x10] sm:$0xff]
    %v208 = vld [vmem:[%s8 + $0x18] sm:$0xff]
    %v209 = vpack.c.bf16 %v206, %v205
    %v210 = vpack.c.bf16 %v208, %v207
    %v211 = vld [vmem:[%s9] sm:$0x1]
    %v213 = vlaneseq
    %v214 = vshrl.u32 %v213, 7
    %v215 = vsub.s32 0, %v214
    %v216 = vrot.slane %v211, %v215
    %v219 = vsel %vm52, %v204, 0
    %221 = vmatprep.subr.bf16.mxu0 0
    %222 = vmatpush1.bf16.msra.mxu0 0
    %223 = vmatprep.subr.bf16.mxu0 0
    %224 = vmatpush1.bf16.msra.mxu0 0
    %225 = vmatprep.subr.bf16.mxu0 0
    %226 = vmatpush1.bf16.msra.mxu0 0
    %227 = vmatprep.subr.bf16.mxu0 0
    %228 = vmatpush1.bf16.msra.mxu0 0
    %229 = vmatprep.subr.bf16.mxu0 0
    %230 = vmatpush1.bf16.msra.mxu0 0
    %231 = vmatprep.subr.bf16.mxu0 0
    %232 = vmatpush1.bf16.msra.mxu0 0
    %233 = vmatprep.subr.bf16.mxu0 0
    %234 = vmatpush1.bf16.msra.mxu0 %v210
    %235 = vmatprep.subr.bf16.mxu0 0
    %236 = vmatpush1.bf16.msra.mxu0 %v209
    %237 = vmatprep.subr.bf16.mxu0 0
    %238 = vmatpush2.bf16.msra.mxu0 0
    %239 = vmatprep.subr.bf16.mxu0 0
    %240 = vmatpush2.bf16.msra.mxu0 0
    %241 = vmatprep.subr.bf16.mxu0 0
    %242 = vmatpush2.bf16.msra.mxu0 0
    %243 = vmatprep.subr.bf16.mxu0 0
    %244 = vmatpush2.bf16.msra.mxu0 0
    %245 = vmatprep.subr.bf16.mxu0 0
    %246 = vmatpush2.bf16.msra.mxu0 0
    %247 = vmatprep.subr.bf16.mxu0 0
    %248 = vmatpush2.bf16.msra.mxu0 0
    %249 = vmatprep.subr.bf16.mxu0 0
    %250 = vmatpush2.bf16.msra.mxu0 0
    %251 = vmatprep.subr.bf16.mxu0 0
    %252 = vmatpush2.bf16.msra.mxu0 0
    %253 = vmatprep.mubr.bf16.mxu0 0
    %254 = vmatmul.mubr.bf16.gmra.mxu0 %v219
    %v255 = vpop.f32.mrf.mxu0
    %v256 = vadd.f32 %v216, %v255
    %v257 = vpop.f32.mrf.mxu0
    %v258 = vpop.f32.mrf.mxu0
    %v259 = vpop.f32.mrf.mxu0
    %260 = vdwg.mxu0
    %v261 = vxor.u32 %v256, 2147483648
    %v262 = vmul.f32 %v261, 1.442695
    %v263 = vpow.pop %v262
    %v264 = vadd.f32 %v263, 1.0
    %v265 = vrcp.pop %v264
    %v266 = vmul.f32 1.0, %v265
    %vm267 = vcmask 130048
    %268 = vst.msk [vmem:[#allocation2] sm:$0xff] %vm267, %v266
    // Predicated region
    $region42: #{mlp_forward.3} parent=1 // pred_check
      _
    $region43: #{mlp_forward.3} parent=1 // pred_check_branch
      %270 = sbr.rel (0) target = $region45
    $region44: #{mlp_forward.3} parent=1 // pred_region
      %s272 = ssub.s32 128, 128
      %273 = vsyncadd [#allocation3], %s272
      %s275 = sshll.u32 [#allocation2], 4
      %s276 = int_to_ptr.vmem [resolvable:$true] %s275
      %278 = dma.vmem_to_hbm [thread:$0]  %s276, 128, %s10, [#allocation3]
    $region45: #{mlp_forward.3} parent=1 // pred_fallthru
      _
    // Predicated region
    $region46: #{mlp_forward.3} parent=1 // pred_check
      _
    $region47: #{mlp_forward.3} parent=1 // pred_check_branch
      %280 = sbr.rel (0) target = $region49
    $region48: #{mlp_forward.3} parent=1 // pred_region
      %281 = dma.done [#allocation3], 128
    $region49: #{mlp_forward.3} parent=1 // pred_fallthru
      _
    %282 = vsyncpa [#allocation3], 1

</llo_original>
